<compile_context>
chip_gen: v7x
topology: tpu7x:2x2x1
jax: 0.10.0
libtpu: 0.0.40
codegen_flags: <defaults>
</compile_context>

<pallas_src>
import functools

import jax
import jax.numpy as jnp
from jax import lax
from jax.experimental import pallas as pl
from jax.experimental.pallas import tpu as pltpu


def _round_up(x, m):
    return ((x + m - 1) // m) * m


def _mlp_kernel(batch_ref, x_ref, w1_ref, b1_ref, w2_ref, b2_ref,
                w3_ref, b3_ref, out_ref, pooled_acc,
                *, num_graphs_padded, apply_sigmoid, pool_dtype):
    k = pl.program_id(0)
    n_steps = pl.num_programs(0)
    tn = x_ref.shape[0]

    # ---- init persistent pooled accumulator ----
    @pl.when(k == 0)
    def _init():
        pooled_acc[...] = jnp.zeros_like(pooled_acc)

    # ---- global_add_pool for this node tile: one-hot @ x on the MXU ----
    seg = batch_ref[...]                                             # (1, TN) i32
    row_ids = lax.broadcasted_iota(jnp.int32, (num_graphs_padded, tn), 0)
    onehot = (row_ids == seg).astype(pool_dtype)                     # (B_pad, TN)
    x_tile = x_ref[...].astype(pool_dtype)                           # (TN, F_pad)
    pooled_acc[...] += jnp.dot(onehot, x_tile,
                               preferred_element_type=jnp.float32)

    # ---- epilogue: 3 affine layers (+ReLU, optional sigmoid), last step only ----
    @pl.when(k == n_steps - 1)
    def _epilogue():
        pooled = pooled_acc[...]
        h1 = jnp.dot(pooled, w1_ref[...],
                     preferred_element_type=jnp.float32) + b1_ref[...]
        h1 = jnp.maximum(h1, 0.0)
        h2 = jnp.dot(h1, w2_ref[...],
                     preferred_element_type=jnp.float32) + b2_ref[...]
        h2 = jnp.maximum(h2, 0.0)
        out = jnp.dot(h2, w3_ref[...],
                      preferred_element_type=jnp.float32) + b3_ref[...]
        if apply_sigmoid:
            out = jax.nn.sigmoid(out)
        out_ref[...] = out.astype(out_ref.dtype)


def mlp_forward(x, batch, params, *, num_graphs,
                apply_sigmoid_in_last_layer=False,
                node_tile=1024, pool_in_bf16=False):
    """x: (N, F) f32; batch: (N,) int in [0, num_graphs); params: (in,out) W, (1,out) b."""
    n_nodes, in_dim = x.shape
    w1, b1 = params["w1"], params["b1"]
    w2, b2 = params["w2"], params["b2"]
    w3, b3 = params["w3"], params["b3"]
    h1_dim, h2_dim, out_dim = w1.shape[1], w2.shape[1], w3.shape[1]

    # ---- lane/sublane-friendly padded shapes (zero padding is inert) ----
    F_pad = _round_up(in_dim, 128)
    H1_pad = _round_up(h1_dim, 128)
    H2_pad = _round_up(h2_dim, 128)
    C_pad = _round_up(out_dim, 128)
    B_pad = _round_up(num_graphs, 8)

    # Node tile: multiple of 256, capped at ~8 MiB of f32 x-tile so the
    # double-buffered input pipeline fits comfortably on every TPU generation
    # (v7x has only 64 MiB VMEM per TensorCore).
    tile_cap = max(256, ((8 * 1024 * 1024) // (F_pad * 4)) // 256 * 256)
    TN = max(256, min(_round_up(node_tile, 256), tile_cap,
                      _round_up(n_nodes, 256)))
    N_pad = _round_up(n_nodes, TN)
    n_steps = N_pad // TN

    f32 = jnp.float32
    x_p = jnp.pad(x.astype(f32),
                  ((0, N_pad - n_nodes), (0, F_pad - in_dim)))
    # Padded nodes get graph id -1 -> never match any one-hot row (dropped).
    batch_p = jnp.pad(batch.astype(jnp.int32), (0, N_pad - n_nodes),
                      constant_values=-1).reshape(1, N_pad)
    w1_p = jnp.pad(w1.astype(f32), ((0, F_pad - in_dim), (0, H1_pad - h1_dim)))
    b1_p = jnp.pad(b1.astype(f32), ((0, 0), (0, H1_pad - h1_dim)))
    w2_p = jnp.pad(w2.astype(f32), ((0, H1_pad - h1_dim), (0, H2_pad - h2_dim)))
    b2_p = jnp.pad(b2.astype(f32), ((0, 0), (0, H2_pad - h2_dim)))
    w3_p = jnp.pad(w3.astype(f32), ((0, H2_pad - h2_dim), (0, C_pad - out_dim)))
    b3_p = jnp.pad(b3.astype(f32), ((0, 0), (0, C_pad - out_dim)))

    pool_dtype = jnp.bfloat16 if pool_in_bf16 else jnp.float32
    kernel = functools.partial(
        _mlp_kernel, num_graphs_padded=B_pad,
        apply_sigmoid=apply_sigmoid_in_last_layer, pool_dtype=pool_dtype)

    grid_spec = pltpu.PrefetchScalarGridSpec(
        num_scalar_prefetch=0,
        grid=(n_steps,),
        in_specs=[
            pl.BlockSpec((1, TN), lambda k: (0, k)),          # batch ids (tiled)
            pl.BlockSpec((TN, F_pad), lambda k: (k, 0)),      # node features (tiled)
            pl.BlockSpec((F_pad, H1_pad), lambda k: (0, 0)),  # w1 (resident)
            pl.BlockSpec((1, H1_pad), lambda k: (0, 0)),      # b1
            pl.BlockSpec((H1_pad, H2_pad), lambda k: (0, 0)), # w2
            pl.BlockSpec((1, H2_pad), lambda k: (0, 0)),      # b2
            pl.BlockSpec((H2_pad, C_pad), lambda k: (0, 0)),  # w3
            pl.BlockSpec((1, C_pad), lambda k: (0, 0)),       # b3
        ],
        out_specs=pl.BlockSpec((B_pad, C_pad), lambda k: (0, 0)),
        scratch_shapes=[pltpu.VMEM((B_pad, F_pad), jnp.float32)],
    )

    out_padded = pl.pallas_call(
        kernel,
        out_shape=jax.ShapeDtypeStruct((B_pad, C_pad), jnp.float32),
        grid_spec=grid_spec,
        compiler_params=pltpu.CompilerParams(
            dimension_semantics=("arbitrary",),
            vmem_limit_bytes=48 * 1024 * 1024),
    )(batch_p, x_p, w1_p, b1_p, w2_p, b2_p, w3_p, b3_p)

    return out_padded[:num_graphs, :out_dim]


def _reference(x, batch, params, num_graphs, apply_sigmoid):
    pooled = jax.ops.segment_sum(x, batch, num_segments=num_graphs)
    h = jnp.maximum(pooled @ params["w1"] + params["b1"], 0.0)
    h = jnp.maximum(h @ params["w2"] + params["b2"], 0.0)
    o = h @ params["w3"] + params["b3"]
    return jax.nn.sigmoid(o) if apply_sigmoid else o


if __name__ == "__main__":
    key = jax.random.PRNGKey(0)

    def init_linear(k, fan_in, fan_out):
        kw, kb = jax.random.split(k)
        bound = 1.0 / jnp.sqrt(fan_in)
        w = jax.random.uniform(kw, (fan_in, fan_out), jnp.float32, -bound, bound)
        b = jax.random.uniform(kb, (1, fan_out), jnp.float32, -bound, bound)
        return w, b

    # --- Test 1: small shapes matching the module (B=2 graphs, F=H=32, C=8) ---
    N, F, B, H, C = 16, 32, 2, 32, 8
    k_x, k_b, k1, k2, k3 = jax.random.split(key, 5)
    x = jax.random.normal(k_x, (N, F), dtype=jnp.float32)
    batch = jnp.sort(jax.random.randint(k_b, (N,), 0, B)).astype(jnp.int32)
    w1, b1 = init_linear(k1, F, H)
    w2, b2 = init_linear(k2, H, H)
    w3, b3 = init_linear(k3, H, C)
    params = {"w1": w1, "b1": b1, "w2": w2, "b2": b2, "w3": w3, "b3": b3}

    apply_sigmoid = True  # hp['apply_sigmoid_in_last_layer']
    out = mlp_forward(x, batch, params, num_graphs=B,
                      apply_sigmoid_in_last_layer=apply_sigmoid)
    out = jax.block_until_ready(out)
    ref = _reference(x, batch, params, B, apply_sigmoid)
    assert out.shape == (B, C)
    assert jnp.allclose(out, ref, atol=1e-5, rtol=1e-5), "mismatch vs reference (test 1)"

    # --- Test 2: N not a multiple of the node tile -> multi-step accumulation ---
    N2, B2 = 700, 5
    k_x2, k_b2 = jax.random.split(jax.random.PRNGKey(1), 2)
    x2 = jax.random.normal(k_x2, (N2, F), dtype=jnp.float32)
    batch2 = jnp.sort(jax.random.randint(k_b2, (N2,), 0, B2)).astype(jnp.int32)
    out2 = mlp_forward(x2, batch2, params, num_graphs=B2,
                       apply_sigmoid_in_last_layer=False, node_tile=256)
    out2 = jax.block_until_ready(out2)
    ref2 = _reference(x2, batch2, params, B2, False)
    assert out2.shape == (B2, C)
    assert jnp.allclose(out2, ref2, atol=1e-4, rtol=1e-4), "mismatch vs reference (test 2)"

    print("KERNEL_OK")
</pallas_src>

<mosaic_0001>
module attributes {stable_mosaic.version = 11 : i64} {
  func.func @_mlp_kernel(%arg0: i32, %arg1: memref<1x256xi32, #tpu.memory_space<vmem>>, %arg2: memref<256x128xf32, #tpu.memory_space<vmem>>, %arg3: memref<128x128xf32, #tpu.memory_space<vmem>>, %arg4: memref<1x128xf32, #tpu.memory_space<vmem>>, %arg5: memref<128x128xf32, #tpu.memory_space<vmem>>, %arg6: memref<1x128xf32, #tpu.memory_space<vmem>>, %arg7: memref<128x128xf32, #tpu.memory_space<vmem>>, %arg8: memref<1x128xf32, #tpu.memory_space<vmem>>, %arg9: memref<8x128xf32, #tpu.memory_space<vmem>>, %arg10: memref<8x128xf32, #tpu.memory_space<vmem>>) attributes {dimension_semantics = [#tpu.dimension_semantics<arbitrary>], iteration_bounds = array<i64: 1>, scalar_prefetch = 0 : i64, scratch_operands = 1 : i64, tpu.core_type = #tpu.core_type<tc>, window_params = [{transform_indices = @transform_0, window_bounds = array<i64: 1, 256>}, {transform_indices = @transform_1, window_bounds = array<i64: 256, 128>}, {pipeline_mode = #tpu.pipeline_mode<synchronous>, transform_indices = @transform_2, window_bounds = array<i64: 128, 128>}, {pipeline_mode = #tpu.pipeline_mode<synchronous>, transform_indices = @transform_3, window_bounds = array<i64: 1, 128>}, {pipeline_mode = #tpu.pipeline_mode<synchronous>, transform_indices = @transform_4, window_bounds = array<i64: 128, 128>}, {pipeline_mode = #tpu.pipeline_mode<synchronous>, transform_indices = @transform_5, window_bounds = array<i64: 1, 128>}, {pipeline_mode = #tpu.pipeline_mode<synchronous>, transform_indices = @transform_6, window_bounds = array<i64: 128, 128>}, {pipeline_mode = #tpu.pipeline_mode<synchronous>, transform_indices = @transform_7, window_bounds = array<i64: 1, 128>}, {pipeline_mode = #tpu.pipeline_mode<synchronous>, transform_indices = @transform_8, window_bounds = array<i64: 8, 128>}]} {
    %c0_i32 = arith.constant 0 : i32
    %0 = arith.cmpi eq, %arg0, %c0_i32 : i32
    %1 = arith.extui %0 : i1 to i32
    %c0_i32_0 = arith.constant 0 : i32
    %2 = arith.cmpi ne, %1, %c0_i32_0 : i32
    scf.if %2 {
      %cst_10 = arith.constant 0.000000e+00 : f32
      %17 = vector.broadcast %cst_10 : f32 to vector<8x128xf32>
      %c0_11 = arith.constant 0 : index
      %c0_12 = arith.constant 0 : index
      %18 = vector.load %arg10[%c0_11, %c0_12] : memref<8x128xf32, #tpu.memory_space<vmem>>, vector<8x128xf32>
      tpu.vector_store %arg10[%c0_11, %c0_12], %17 {strides = array<i32>} : memref<8x128xf32, #tpu.memory_space<vmem>>, vector<8x128xf32>,
    } else {
    }
    %c0 = arith.constant 0 : index
    %c0_1 = arith.constant 0 : index
    %3 = vector.load %arg1[%c0, %c0_1] : memref<1x256xi32, #tpu.memory_space<vmem>>, vector<1x256xi32>
    %4 = tpu.iota {dimensions = array<i32: 0>} : vector<8x256xi32>
    %5 = vector.broadcast %3 : vector<1x256xi32> to vector<8x256xi32>
    %6 = arith.cmpi eq, %4, %5 : vector<8x256xi32>
    %7 = arith.extui %6 : vector<8x256xi1> to vector<8x256xi32>
    %8 = arith.sitofp %7 : vector<8x256xi32> to vector<8x256xf32>
    %c0_2 = arith.constant 0 : index
    %c0_3 = arith.constant 0 : index
    %9 = vector.load %arg2[%c0_2, %c0_3] : memref<256x128xf32, #tpu.memory_space<vmem>>, vector<256x128xf32>
    %c0_4 = arith.constant 0 : index
    %c0_5 = arith.constant 0 : index
    %10 = vector.load %arg10[%c0_4, %c0_5] : memref<8x128xf32, #tpu.memory_space<vmem>>, vector<8x128xf32>
    %cst = arith.constant dense<0.000000e+00> : vector<8x128xf32>
    %11 = tpu.matmul %8, %9, %cst {dimension_numbers = #tpu.dot_dimension_numbers<[1], [0], [0], [1], [0, 0, 1, 1], [], []>} : vector<8x256xf32>, vector<256x128xf32>, vector<8x128xf32> -> vector<8x128xf32>
    %12 = arith.addf %10, %11 : vector<8x128xf32>
    %c0_6 = arith.constant 0 : index
    %c0_7 = arith.constant 0 : index
    %13 = vector.load %arg10[%c0_6, %c0_7] : memref<8x128xf32, #tpu.memory_space<vmem>>, vector<8x128xf32>
    tpu.vector_store %arg10[%c0_6, %c0_7], %12 {strides = array<i32>} : memref<8x128xf32, #tpu.memory_space<vmem>>, vector<8x128xf32>,
    %c0_i32_8 = arith.constant 0 : i32
    %14 = arith.cmpi eq, %arg0, %c0_i32_8 : i32
    %15 = arith.extui %14 : i1 to i32
    %c0_i32_9 = arith.constant 0 : i32
    %16 = arith.cmpi ne, %15, %c0_i32_9 : i32
    scf.if %16 {
      %c0_10 = arith.constant 0 : index
      %c0_11 = arith.constant 0 : index
      %17 = vector.load %arg10[%c0_10, %c0_11] : memref<8x128xf32, #tpu.memory_space<vmem>>, vector<8x128xf32>
      %c0_12 = arith.constant 0 : index
      %c0_13 = arith.constant 0 : index
      %18 = vector.load %arg3[%c0_12, %c0_13] : memref<128x128xf32, #tpu.memory_space<vmem>>, vector<128x128xf32>
      %cst_14 = arith.constant dense<0.000000e+00> : vector<8x128xf32>
      %19 = tpu.matmul %17, %18, %cst_14 {dimension_numbers = #tpu.dot_dimension_numbers<[1], [0], [0], [1], [0, 0, 1, 1], [], []>} : vector<8x128xf32>, vector<128x128xf32>, vector<8x128xf32> -> vector<8x128xf32>
      %c0_15 = arith.constant 0 : index
      %c0_16 = arith.constant 0 : index
      %20 = vector.load %arg4[%c0_15, %c0_16] : memref<1x128xf32, #tpu.memory_space<vmem>>, vector<1x128xf32>
      %21 = vector.broadcast %20 : vector<1x128xf32> to vector<8x128xf32>
      %22 = arith.addf %19, %21 : vector<8x128xf32>
      %cst_17 = arith.constant 0.000000e+00 : f32
      %23 = vector.broadcast %cst_17 : f32 to vector<8x128xf32>
      %24 = arith.maximumf %22, %23 : vector<8x128xf32>
      %c0_18 = arith.constant 0 : index
      %c0_19 = arith.constant 0 : index
      %25 = vector.load %arg5[%c0_18, %c0_19] : memref<128x128xf32, #tpu.memory_space<vmem>>, vector<128x128xf32>
      %cst_20 = arith.constant dense<0.000000e+00> : vector<8x128xf32>
      %26 = tpu.matmul %24, %25, %cst_20 {dimension_numbers = #tpu.dot_dimension_numbers<[1], [0], [0], [1], [0, 0, 1, 1], [], []>} : vector<8x128xf32>, vector<128x128xf32>, vector<8x128xf32> -> vector<8x128xf32>
      %c0_21 = arith.constant 0 : index
      %c0_22 = arith.constant 0 : index
      %27 = vector.load %arg6[%c0_21, %c0_22] : memref<1x128xf32, #tpu.memory_space<vmem>>, vector<1x128xf32>
      %28 = vector.broadcast %27 : vector<1x128xf32> to vector<8x128xf32>
      %29 = arith.addf %26, %28 : vector<8x128xf32>
      %cst_23 = arith.constant 0.000000e+00 : f32
      %30 = vector.broadcast %cst_23 : f32 to vector<8x128xf32>
      %31 = arith.maximumf %29, %30 : vector<8x128xf32>
      %c0_24 = arith.constant 0 : index
      %c0_25 = arith.constant 0 : index
      %32 = vector.load %arg7[%c0_24, %c0_25] : memref<128x128xf32, #tpu.memory_space<vmem>>, vector<128x128xf32>
      %cst_26 = arith.constant dense<0.000000e+00> : vector<8x128xf32>
      %33 = tpu.matmul %31, %32, %cst_26 {dimension_numbers = #tpu.dot_dimension_numbers<[1], [0], [0], [1], [0, 0, 1, 1], [], []>} : vector<8x128xf32>, vector<128x128xf32>, vector<8x128xf32> -> vector<8x128xf32>
      %c0_27 = arith.constant 0 : index
      %c0_28 = arith.constant 0 : index
      %34 = vector.load %arg8[%c0_27, %c0_28] : memref<1x128xf32, #tpu.memory_space<vmem>>, vector<1x128xf32>
      %35 = vector.broadcast %34 : vector<1x128xf32> to vector<8x128xf32>
      %36 = arith.addf %33, %35 : vector<8x128xf32>
      %37 = arith.negf %36 : vector<8x128xf32>
      %38 = math.exp %37 : vector<8x128xf32>
      %cst_29 = arith.constant 1.000000e+00 : f32
      %39 = vector.broadcast %cst_29 : f32 to vector<8x128xf32>
      %40 = arith.addf %39, %38 : vector<8x128xf32>
      %41 = arith.divf %39, %40 : vector<8x128xf32>
      %c0_30 = arith.constant 0 : index
      %c0_31 = arith.constant 0 : index
      %42 = vector.load %arg9[%c0_30, %c0_31] : memref<8x128xf32, #tpu.memory_space<vmem>>, vector<8x128xf32>
      tpu.vector_store %arg9[%c0_30, %c0_31], %41 {strides = array<i32>} : memref<8x128xf32, #tpu.memory_space<vmem>>, vector<8x128xf32>,
    } else {
    }
    return
  }
  func.func @transform_0(%arg0: i32) -> (i32, i32) {
    %c0_i32 = arith.constant 0 : i32
    %c0_i32_0 = arith.constant 0 : i32
    return %c0_i32, %arg0 : i32, i32
  }
  func.func @transform_1(%arg0: i32) -> (i32, i32) {
    %c0_i32 = arith.constant 0 : i32
    %c0_i32_0 = arith.constant 0 : i32
    return %arg0, %c0_i32 : i32, i32
  }
  func.func @transform_2(%arg0: i32) -> (i32, i32) {
    %c0_i32 = arith.constant 0 : i32
    %c0_i32_0 = arith.constant 0 : i32
    %c0_i32_1 = arith.constant 0 : i32
    return %c0_i32, %c0_i32_0 : i32, i32
  }
  func.func @transform_3(%arg0: i32) -> (i32, i32) {
    %c0_i32 = arith.constant 0 : i32
    %c0_i32_0 = arith.constant 0 : i32
    %c0_i32_1 = arith.constant 0 : i32
    return %c0_i32, %c0_i32_0 : i32, i32
  }
  func.func @transform_4(%arg0: i32) -> (i32, i32) {
    %c0_i32 = arith.constant 0 : i32
    %c0_i32_0 = arith.constant 0 : i32
    %c0_i32_1 = arith.constant 0 : i32
    return %c0_i32, %c0_i32_0 : i32, i32
  }
  func.func @transform_5(%arg0: i32) -> (i32, i32) {
    %c0_i32 = arith.constant 0 : i32
    %c0_i32_0 = arith.constant 0 : i32
    %c0_i32_1 = arith.constant 0 : i32
    return %c0_i32, %c0_i32_0 : i32, i32
  }
  func.func @transform_6(%arg0: i32) -> (i32, i32) {
    %c0_i32 = arith.constant 0 : i32
    %c0_i32_0 = arith.constant 0 : i32
    %c0_i32_1 = arith.constant 0 : i32
    return %c0_i32, %c0_i32_0 : i32, i32
  }
  func.func @transform_7(%arg0: i32) -> (i32, i32) {
    %c0_i32 = arith.constant 0 : i32
    %c0_i32_0 = arith.constant 0 : i32
    %c0_i32_1 = arith.constant 0 : i32
    return %c0_i32, %c0_i32_0 : i32, i32
  }
  func.func @transform_8(%arg0: i32) -> (i32, i32) {
    %c0_i32 = arith.constant 0 : i32
    %c0_i32_0 = arith.constant 0 : i32
    %c0_i32_1 = arith.constant 0 : i32
    return %c0_i32, %c0_i32_0 : i32, i32
  }
}

</mosaic_0001>

<llo_original>
// kernel: tpu_custom_call.1
$region0: #{tpu_custom_call.1}
  #allocation0 [shape = 'u32[]', space=smem, size = 0x4, offset = 0x4, fixed_abs, tag = 'smem constant byte address 0x4 - core index']
  #allocation1 [shape = 'u32[144,128]{1,0:T(1,128)}', space=vmem, size = 0x12000, scoped, tag = 'internal scratch']
  #allocation2 [shape = 'f32[8,128]{1,0:T(8,128)}', space=vmem, size = 0x1000, scoped, tag = 'scratch operand']
  %s0 = inlined_call_operand.hbm [shape: s32[1,256], index: 0, kind: input, shape index: {}]
  %s1 = inlined_call_operand.hbm [shape: f32[256,128], index: 1, kind: input, shape index: {}]
  %s2 = inlined_call_operand.hbm [shape: f32[128,128], index: 2, kind: input, shape index: {}]
  %s3 = inlined_call_operand.vmem [shape: f32[1,128], index: 3, kind: input, shape index: {}]
  %s4 = inlined_call_operand.hbm [shape: f32[128,128], index: 4, kind: input, shape index: {}]
  %s5 = inlined_call_operand.vmem [shape: f32[1,128], index: 5, kind: input, shape index: {}]
  %s6 = inlined_call_operand.hbm [shape: f32[128,128], index: 6, kind: input, shape index: {}]
  %s7 = inlined_call_operand.vmem [shape: f32[1,128], index: 7, kind: input, shape index: {}]
  %s8 = inlined_call_operand.hbm [shape: f32[8,128], index: 8, kind: output, shape index: {}]
  %s9 = sld [smem:[#allocation0]]
  $region70: #{tpu_custom_call.1} parent=0
    _
  %s11 = ssub.s32 1, %s9
  %s12 = scalar_select 0, %s11, %s9
  $region1: #{tpu_custom_call.1} parent=0
    #allocation3 [shape = 'u8[1024]{0}', space=vmem, size = 0x400, scoped, tag = 'input window, operand 0, single buffered']
    #allocation4 [shape = 's32[1]{0}', space=sflag, size = 0x4, scoped, tag = 'scoped memory for tpu_custom_call.1']
    #allocation5 [shape = 's32[1]{0}', space=sflag, size = 0x4, scoped, tag = 'scoped memory for tpu_custom_call.1']
    #allocation6 [shape = 'u8[131072]{0}', space=vmem, size = 0x20000, scoped, tag = 'input window, operand 1, single buffered']
    #allocation7 [shape = 's32[1]{0}', space=sflag, size = 0x4, scoped, tag = 'scoped memory for tpu_custom_call.1']
    #allocation8 [shape = 'u8[65536]{0}', space=vmem, size = 0x10000, scoped, tag = 'input window, operand 2, single buffered']
    #allocation9 [shape = 'u8[65536]{0}', space=vmem, size = 0x10000, scoped, tag = 'input window, operand 4, single buffered']
    #allocation10 [shape = 's32[1]{0}', space=sflag, size = 0x4, scoped, tag = 'scoped memory for tpu_custom_call.1']
    #allocation11 [shape = 'u8[65536]{0}', space=vmem, size = 0x10000, scoped, tag = 'input window, operand 6, single buffered']
    #allocation12 [shape = 'u8[4096]{0}', space=vmem, size = 0x1000, scoped, tag = 'output window, operand 0, single buffered']
    %13 = vsyncpa [#allocation4], 0
    %14 = vsyncpa [#allocation7], 0
    %15 = vsyncpa [#allocation10], 0
    %16 = vsyncpa [#allocation5], 0
    // Predicated region
    $region2: #{tpu_custom_call.1} parent=1 // pred_check
      _
    $region3: #{tpu_custom_call.1} parent=1 // pred_check_branch
      %18 = sbr.rel (0) target = $region5
    $region4: #{tpu_custom_call.1} parent=1 // pred_region
      %s20 = ssub.s32 32, 32
      %21 = vsyncadd [#allocation4], %s20
      %s23 = sshll.u32 [#allocation3], 4
      %s24 = int_to_ptr.vmem [resolvable:$true] %s23
      %26 = dma.hbm_to_vmem [thread:$0]  %s0, 32, %s24, [#allocation4]
    $region5: #{tpu_custom_call.1} parent=1 // pred_fallthru
      _
    // Predicated region
    $region6: #{tpu_custom_call.1} parent=1 // pred_check
      _
    $region7: #{tpu_custom_call.1} parent=1 // pred_check_branch
      %28 = sbr.rel (0) target = $region9
    $region8: #{tpu_custom_call.1} parent=1 // pred_region
      %s30 = ssub.s32 4096, 4096
      %31 = vsyncadd [#allocation7], %s30
      %s32 = sshll.u32 [#allocation6], 4
      %s33 = int_to_ptr.vmem [resolvable:$true] %s32
      %38 = dma.hbm_to_vmem [thread:$0]  %s1, 4096, %s33, [#allocation7], 128, 128, 8
    $region9: #{tpu_custom_call.1} parent=1 // pred_fallthru
      _
    // Predicated region
    $region10: #{tpu_custom_call.1} parent=1 // pred_check
      _
    $region11: #{tpu_custom_call.1} parent=1 // pred_check_branch
      %40 = sbr.rel (0) target = $region13
    $region12: #{tpu_custom_call.1} parent=1 // pred_region
      %s42 = ssub.s32 2048, 2048
      %43 = vsyncadd [#allocation7], %s42
      %s44 = sshll.u32 [#allocation8], 4
      %s45 = int_to_ptr.vmem [resolvable:$true] %s44
      %50 = dma.hbm_to_vmem [thread:$0]  %s2, 2048, %s45, [#allocation7], 128, 128, 8
    $region13: #{tpu_custom_call.1} parent=1 // pred_fallthru
      _
    // Predicated region
    $region14: #{tpu_custom_call.1} parent=1 // pred_check
      _
    $region15: #{tpu_custom_call.1} parent=1 // pred_check_branch
      %52 = sbr.rel (0) target = $region17
    $region16: #{tpu_custom_call.1} parent=1 // pred_region
      _
    $region17: #{tpu_custom_call.1} parent=1 // pred_fallthru
      _
    // Predicated region
    $region18: #{tpu_custom_call.1} parent=1 // pred_check
      _
    $region19: #{tpu_custom_call.1} parent=1 // pred_check_branch
      %54 = sbr.rel (0) target = $region21
    $region20: #{tpu_custom_call.1} parent=1 // pred_region
      %s56 = ssub.s32 2048, 2048
      %57 = vsyncadd [#allocation10], %s56
      %s58 = sshll.u32 [#allocation9], 4
      %s59 = int_to_ptr.vmem [resolvable:$true] %s58
      %64 = dma.hbm_to_vmem [thread:$0]  %s4, 2048, %s59, [#allocation10], 128, 128, 8
    $region21: #{tpu_custom_call.1} parent=1 // pred_fallthru
      _
    // Predicated region
    $region22: #{tpu_custom_call.1} parent=1 // pred_check
      _
    $region23: #{tpu_custom_call.1} parent=1 // pred_check_branch
      %66 = sbr.rel (0) target = $region25
    $region24: #{tpu_custom_call.1} parent=1 // pred_region
      _
    $region25: #{tpu_custom_call.1} parent=1 // pred_fallthru
      _
    // Predicated region
    $region26: #{tpu_custom_call.1} parent=1 // pred_check
      _
    $region27: #{tpu_custom_call.1} parent=1 // pred_check_branch
      %68 = sbr.rel (0) target = $region29
    $region28: #{tpu_custom_call.1} parent=1 // pred_region
      %s70 = ssub.s32 2048, 2048
      %71 = vsyncadd [#allocation10], %s70
      %s72 = sshll.u32 [#allocation11], 4
      %s73 = int_to_ptr.vmem [resolvable:$true] %s72
      %78 = dma.hbm_to_vmem [thread:$0]  %s6, 2048, %s73, [#allocation10], 128, 128, 8
    $region29: #{tpu_custom_call.1} parent=1 // pred_fallthru
      _
    // Predicated region
    $region30: #{tpu_custom_call.1} parent=1 // pred_check
      _
    $region31: #{tpu_custom_call.1} parent=1 // pred_check_branch
      %80 = sbr.rel (0) target = $region33
    $region32: #{tpu_custom_call.1} parent=1 // pred_region
      _
    $region33: #{tpu_custom_call.1} parent=1 // pred_fallthru
      _
    // Predicated region
    $region34: #{tpu_custom_call.1} parent=1 // pred_check
      _
    $region35: #{tpu_custom_call.1} parent=1 // pred_check_branch
      %82 = sbr.rel (0) target = $region37
    $region36: #{tpu_custom_call.1} parent=1 // pred_region
      %83 = dma.done [#allocation4], 32
    $region37: #{tpu_custom_call.1} parent=1 // pred_fallthru
      _
    // Predicated region
    $region38: #{tpu_custom_call.1} parent=1 // pred_check
      _
    $region39: #{tpu_custom_call.1} parent=1 // pred_check_branch
      %85 = sbr.rel (0) target = $region41
    $region40: #{tpu_custom_call.1} parent=1 // pred_region
      %86 = dma.done [#allocation7], 4096
    $region41: #{tpu_custom_call.1} parent=1 // pred_fallthru
      _
    // Predicated region
    $region42: #{tpu_custom_call.1} parent=1 // pred_check
      _
    $region43: #{tpu_custom_call.1} parent=1 // pred_check_branch
      %88 = sbr.rel (0) target = $region45
    $region44: #{tpu_custom_call.1} parent=1 // pred_region
      %89 = dma.done [#allocation7], 2048
    $region45: #{tpu_custom_call.1} parent=1 // pred_fallthru
      _
    // Predicated region
    $region46: #{tpu_custom_call.1} parent=1 // pred_check
      _
    $region47: #{tpu_custom_call.1} parent=1 // pred_check_branch
      %91 = sbr.rel (0) target = $region49
    $region48: #{tpu_custom_call.1} parent=1 // pred_region
      %92 = dma.done [#allocation10], 2048
    $region49: #{tpu_custom_call.1} parent=1 // pred_fallthru
      _
    // Predicated region
    $region50: #{tpu_custom_call.1} parent=1 // pred_check
      _
    $region51: #{tpu_custom_call.1} parent=1 // pred_check_branch
      %94 = sbr.rel (0) target = $region53
    $region52: #{tpu_custom_call.1} parent=1 // pred_region
      %95 = dma.done [#allocation10], 2048
    $region53: #{tpu_custom_call.1} parent=1 // pred_fallthru
      _
    %p96 = scmp.eq.s32.totalorder 0, 0
    // Predicated region
    $region54: #{tpu_custom_call.1} parent=1 // pred_check
      %p97 = pneg %p96
    $region55: #{tpu_custom_call.1} parent=1 // pred_check_branch
      %99 = sbr.rel (%p97) target = $region57
    $region56: #{tpu_custom_call.1} parent=1 // pred_region
      %100 = vst [vmem:[#allocation2] sm:$0xff] 0.0
    $region57: #{tpu_custom_call.1} parent=1 // pred_fallthru
      _
    %v101 = vld [vmem:[#allocation3] sm:$0x3]
    %v102 = vlaneseq
    %v103 = vshrl.u32 %v102, 7
    %v104 = vlaneseq
    %v105 = vshrl.u32 %v104, 7
    %v106 = vsub.s32 0, %v105
    %v107 = vrot.slane %v101, %v106
    %v108 = vlaneseq
    %v109 = vshrl.u32 %v108, 7
    %v110 = vsub.s32 1, %v109
    %v111 = vrot.slane %v101, %v110
    %vm112 = vcmp.eq.s32.totalorder %v103, %v107
    %vm113 = vcmp.eq.s32.totalorder %v103, %v111
    %v114 = vsel %vm112, 1, 0
    %v115 = vsel %vm113, 1, 0
    %v116 = vcvt.s32.f32 %v114
    %v117 = vcvt.s32.f32 %v115
    %v118 = vld [vmem:[#allocation6] sm:$0xff]
    %v119 = vld [vmem:[#allocation6 + $0x8] sm:$0xff]
    %v120 = vld [vmem:[#allocation6 + $0x10] sm:$0xff]
    %v121 = vld [vmem:[#allocation6 + $0x18] sm:$0xff]
    %v122 = vld [vmem:[#allocation6 + $0x20] sm:$0xff]
    %v123 = vld [vmem:[#allocation6 + $0x28] sm:$0xff]
    %v124 = vld [vmem:[#allocation6 + $0x30] sm:$0xff]
    %v125 = vld [vmem:[#allocation6 + $0x38] sm:$0xff]
    %v126 = vld [vmem:[#allocation6 + $0x40] sm:$0xff]
    %v127 = vld [vmem:[#allocation6 + $0x48] sm:$0xff]
    %v128 = vld [vmem:[#allocation6 + $0x50] sm:$0xff]
    %v129 = vld [vmem:[#allocation6 + $0x58] sm:$0xff]
    %v130 = vld [vmem:[#allocation6 + $0x60] sm:$0xff]
    %v131 = vld [vmem:[#allocation6 + $0x68] sm:$0xff]
    %v132 = vld [vmem:[#allocation6 + $0x70] sm:$0xff]
    %v133 = vld [vmem:[#allocation6 + $0x78] sm:$0xff]
    %v134 = vld [vmem:[#allocation6 + $0x80] sm:$0xff]
    %v135 = vld [vmem:[#allocation6 + $0x88] sm:$0xff]
    %v136 = vld [vmem:[#allocation6 + $0x90] sm:$0xff]
    %v137 = vld [vmem:[#allocation6 + $0x98] sm:$0xff]
    %v138 = vld [vmem:[#allocation6 + $0xa0] sm:$0xff]
    %v139 = vld [vmem:[#allocation6 + $0xa8] sm:$0xff]
    %v140 = vld [vmem:[#allocation6 + $0xb0] sm:$0xff]
    %v141 = vld [vmem:[#allocation6 + $0xb8] sm:$0xff]
    %v142 = vld [vmem:[#allocation6 + $0xc0] sm:$0xff]
    %v143 = vld [vmem:[#allocation6 + $0xc8] sm:$0xff]
    %v144 = vld [vmem:[#allocation6 + $0xd0] sm:$0xff]
    %v145 = vld [vmem:[#allocation6 + $0xd8] sm:$0xff]
    %v146 = vld [vmem:[#allocation6 + $0xe0] sm:$0xff]
    %v147 = vld [vmem:[#allocation6 + $0xe8] sm:$0xff]
    %v148 = vld [vmem:[#allocation6 + $0xf0] sm:$0xff]
    %v149 = vld [vmem:[#allocation6 + $0xf8] sm:$0xff]
    %v150 = vld [vmem:[#allocation2] sm:$0xff]
    %151 = vmatprep.subr.mxu0 0.0
    %152 = vmatpush1.msra.mxu0 %v118
    %153 = vmatprep.subr.mxu0 0.0
    %154 = vmatpush1.msra.mxu0 %v119
    %155 = vmatprep.subr.mxu0 0.0
    %156 = vmatpush1.msra.mxu0 %v120
    %157 = vmatprep.subr.mxu0 0.0
    %158 = vmatpush1.msra.mxu0 %v121
    %159 = vmatprep.subr.mxu0 0.0
    %160 = vmatpush1.msra.mxu0 %v122
    %161 = vmatprep.subr.mxu0 0.0
    %162 = vmatpush1.msra.mxu0 %v123
    %163 = vmatprep.subr.mxu0 0.0
    %164 = vmatpush1.msra.mxu0 %v124
    %165 = vmatprep.subr.mxu0 0.0
    %166 = vmatpush1.msra.mxu0 %v125
    %167 = vmatprep.subr.mxu0 0.0
    %168 = vmatpush1.msra.mxu0 %v126
    %169 = vmatprep.subr.mxu0 0.0
    %170 = vmatpush1.msra.mxu0 %v127
    %171 = vmatprep.subr.mxu0 0.0
    %172 = vmatpush1.msra.mxu0 %v128
    %173 = vmatprep.subr.mxu0 0.0
    %174 = vmatpush1.msra.mxu0 %v129
    %175 = vmatprep.subr.mxu0 0.0
    %176 = vmatpush1.msra.mxu0 %v130
    %177 = vmatprep.subr.mxu0 0.0
    %178 = vmatpush1.msra.mxu0 %v131
    %179 = vmatprep.subr.mxu0 0.0
    %180 = vmatpush1.msra.mxu0 %v132
    %181 = vmatprep.subr.mxu0 0.0
    %182 = vmatpush1.msra.mxu0 %v133
    %183 = vmatprep.subr.mxu0 0.0
    %184 = vmatpush1.msra.mxu0 %v134
    %185 = vmatprep.subr.mxu0 0.0
    %186 = vmatpush1.msra.mxu0 %v135
    %187 = vmatprep.subr.mxu0 0.0
    %188 = vmatpush1.msra.mxu0 %v136
    %189 = vmatprep.subr.mxu0 0.0
    %190 = vmatpush1.msra.mxu0 %v137
    %191 = vmatprep.subr.mxu0 0.0
    %192 = vmatpush1.msra.mxu0 %v138
    %193 = vmatprep.subr.mxu0 0.0
    %194 = vmatpush1.msra.mxu0 %v139
    %195 = vmatprep.subr.mxu0 0.0
    %196 = vmatpush1.msra.mxu0 %v140
    %197 = vmatprep.subr.mxu0 0.0
    %198 = vmatpush1.msra.mxu0 %v141
    %199 = vmatprep.subr.mxu0 0.0
    %200 = vmatpush1.msra.mxu0 %v142
    %201 = vmatprep.subr.mxu0 0.0
    %202 = vmatpush1.msra.mxu0 %v143
    %203 = vmatprep.subr.mxu0 0.0
    %204 = vmatpush1.msra.mxu0 %v144
    %205 = vmatprep.subr.mxu0 0.0
    %206 = vmatpush1.msra.mxu0 %v145
    %207 = vmatprep.subr.mxu0 0.0
    %208 = vmatpush1.msra.mxu0 %v146
    %209 = vmatprep.subr.mxu0 0.0
    %210 = vmatpush1.msra.mxu0 %v147
    %211 = vmatprep.subr.mxu0 0.0
    %212 = vmatpush1.msra.mxu0 %v148
    %213 = vmatprep.subr.mxu0 0.0
    %214 = vmatpush1.msra.mxu0 %v149
    %215 = vmatprep.mubr.f32.mxu0 %v117
    %216 = vmatmul.mubr.f32.gmra.mrb[0].mxu0 %v116
    %v217 = vpop.f32.mrb[0].mxu0
    %v218 = vadd.f32 0.0, %v217
    %v219 = vpop.f32.mrb[0].mxu0
    %220 = vdwg.mxu0
    %v221 = vadd.f32 %v150, %v218
    %222 = vst [vmem:[#allocation2] sm:$0xff] %v221
    // Predicated region
    $region58: #{tpu_custom_call.1} parent=1 // pred_check
      %p223 = pneg %p96
    $region59: #{tpu_custom_call.1} parent=1 // pred_check_branch
      %225 = sbr.rel (%p223) target = $region61
    $region60: #{tpu_custom_call.1} parent=1 // pred_region
      %v226 = vld [vmem:[#allocation2] sm:$0xff]
      %v227 = vld [vmem:[#allocation8] sm:$0xff]
      %v228 = vld [vmem:[#allocation8 + $0x8] sm:$0xff]
      %v229 = vld [vmem:[#allocation8 + $0x10] sm:$0xff]
      %v230 = vld [vmem:[#allocation8 + $0x18] sm:$0xff]
      %v231 = vld [vmem:[#allocation8 + $0x20] sm:$0xff]
      %v232 = vld [vmem:[#allocation8 + $0x28] sm:$0xff]
      %v233 = vld [vmem:[#allocation8 + $0x30] sm:$0xff]
      %v234 = vld [vmem:[#allocation8 + $0x38] sm:$0xff]
      %v235 = vld [vmem:[#allocation8 + $0x40] sm:$0xff]
      %v236 = vld [vmem:[#allocation8 + $0x48] sm:$0xff]
      %v237 = vld [vmem:[#allocation8 + $0x50] sm:$0xff]
      %v238 = vld [vmem:[#allocation8 + $0x58] sm:$0xff]
      %v239 = vld [vmem:[#allocation8 + $0x60] sm:$0xff]
      %v240 = vld [vmem:[#allocation8 + $0x68] sm:$0xff]
      %v241 = vld [vmem:[#allocation8 + $0x70] sm:$0xff]
      %v242 = vld [vmem:[#allocation8 + $0x78] sm:$0xff]
      %v243 = vld [vmem:[%s3] sm:$0x1]
      %v245 = vlaneseq
      %v246 = vshrl.u32 %v245, 7
      %v247 = vsub.s32 0, %v246
      %v248 = vrot.slane %v243, %v247
      %250 = vmatprep.subr.mxu0 0.0
      %251 = vmatpush1.msra.mxu0 %v227
      %252 = vmatprep.subr.mxu0 0.0
      %253 = vmatpush1.msra.mxu0 %v228
      %254 = vmatprep.subr.mxu0 0.0
      %255 = vmatpush1.msra.mxu0 %v229
      %256 = vmatprep.subr.mxu0 0.0
      %257 = vmatpush1.msra.mxu0 %v230
      %258 = vmatprep.subr.mxu0 0.0
      %259 = vmatpush1.msra.mxu0 %v231
      %260 = vmatprep.subr.mxu0 0.0
      %261 = vmatpush1.msra.mxu0 %v232
      %262 = vmatprep.subr.mxu0 0.0
      %263 = vmatpush1.msra.mxu0 %v233
      %264 = vmatprep.subr.mxu0 0.0
      %265 = vmatpush1.msra.mxu0 %v234
      %266 = vmatprep.subr.mxu0 0.0
      %267 = vmatpush1.msra.mxu0 %v235
      %268 = vmatprep.subr.mxu0 0.0
      %269 = vmatpush1.msra.mxu0 %v236
      %270 = vmatprep.subr.mxu0 0.0
      %271 = vmatpush1.msra.mxu0 %v237
      %272 = vmatprep.subr.mxu0 0.0
      %273 = vmatpush1.msra.mxu0 %v238
      %274 = vmatprep.subr.mxu0 0.0
      %275 = vmatpush1.msra.mxu0 %v239
      %276 = vmatprep.subr.mxu0 0.0
      %277 = vmatpush1.msra.mxu0 %v240
      %278 = vmatprep.subr.mxu0 0.0
      %279 = vmatpush1.msra.mxu0 %v241
      %280 = vmatprep.subr.mxu0 0.0
      %281 = vmatpush1.msra.mxu0 %v242
      %282 = vmatprep.subr.mxu0 0.0
      %283 = vmatpush1.msra.mxu0 0.0
      %284 = vmatprep.subr.mxu0 0.0
      %285 = vmatpush1.msra.mxu0 0.0
      %286 = vmatprep.subr.mxu0 0.0
      %287 = vmatpush1.msra.mxu0 0.0
      %288 = vmatprep.subr.mxu0 0.0
      %289 = vmatpush1.msra.mxu0 0.0
      %290 = vmatprep.subr.mxu0 0.0
      %291 = vmatpush1.msra.mxu0 0.0
      %292 = vmatprep.subr.mxu0 0.0
      %293 = vmatpush1.msra.mxu0 0.0
      %294 = vmatprep.subr.mxu0 0.0
      %295 = vmatpush1.msra.mxu0 0.0
      %296 = vmatprep.subr.mxu0 0.0
      %297 = vmatpush1.msra.mxu0 0.0
      %298 = vmatprep.subr.mxu0 0.0
      %299 = vmatpush1.msra.mxu0 0.0
      %300 = vmatprep.subr.mxu0 0.0
      %301 = vmatpush1.msra.mxu0 0.0
      %302 = vmatprep.subr.mxu0 0.0
      %303 = vmatpush1.msra.mxu0 0.0
      %304 = vmatprep.subr.mxu0 0.0
      %305 = vmatpush1.msra.mxu0 0.0
      %306 = vmatprep.subr.mxu0 0.0
      %307 = vmatpush1.msra.mxu0 0.0
      %308 = vmatprep.subr.mxu0 0.0
      %309 = vmatpush1.msra.mxu0 0.0
      %310 = vmatprep.subr.mxu0 0.0
      %311 = vmatpush1.msra.mxu0 0.0
      %312 = vmatprep.subr.mxu0 0.0
      %313 = vmatpush1.msra.mxu0 0.0
      %314 = vmatprep.mubr.f32.mxu0 0.0
      %315 = vmatmul.mubr.f32.gmra.mrb[0].mxu0 %v226
      %v316 = vpop.f32.mrb[0].mxu0
      %v317 = vadd.f32 %v248, %v316
      %v318 = vpop.f32.mrb[0].mxu0
      %319 = vdwg.mxu0
      %v320 = vmax.f32 %v317, 0.0
      %v321 = vld [vmem:[#allocation9] sm:$0xff]
      %v322 = vld [vmem:[#allocation9 + $0x8] sm:$0xff]
      %v323 = vld [vmem:[#allocation9 + $0x10] sm:$0xff]
      %v324 = vld [vmem:[#allocation9 + $0x18] sm:$0xff]
      %v325 = vld [vmem:[#allocation9 + $0x20] sm:$0xff]
      %v326 = vld [vmem:[#allocation9 + $0x28] sm:$0xff]
      %v327 = vld [vmem:[#allocation9 + $0x30] sm:$0xff]
      %v328 = vld [vmem:[#allocation9 + $0x38] sm:$0xff]
      %v329 = vld [vmem:[#allocation9 + $0x40] sm:$0xff]
      %v330 = vld [vmem:[#allocation9 + $0x48] sm:$0xff]
      %v331 = vld [vmem:[#allocation9 + $0x50] sm:$0xff]
      %v332 = vld [vmem:[#allocation9 + $0x58] sm:$0xff]
      %v333 = vld [vmem:[#allocation9 + $0x60] sm:$0xff]
      %v334 = vld [vmem:[#allocation9 + $0x68] sm:$0xff]
      %v335 = vld [vmem:[#allocation9 + $0x70] sm:$0xff]
      %v336 = vld [vmem:[#allocation9 + $0x78] sm:$0xff]
      %v337 = vld [vmem:[%s5] sm:$0x1]
      %v339 = vlaneseq
      %v340 = vshrl.u32 %v339, 7
      %v341 = vsub.s32 0, %v340
      %v342 = vrot.slane %v337, %v341
      %344 = vmatprep.subr.mxu0 0.0
      %345 = vmatpush1.msra.mxu0 %v321
      %346 = vmatprep.subr.mxu0 0.0
      %347 = vmatpush1.msra.mxu0 %v322
      %348 = vmatprep.subr.mxu0 0.0
      %349 = vmatpush1.msra.mxu0 %v323
      %350 = vmatprep.subr.mxu0 0.0
      %351 = vmatpush1.msra.mxu0 %v324
      %352 = vmatprep.subr.mxu0 0.0
      %353 = vmatpush1.msra.mxu0 %v325
      %354 = vmatprep.subr.mxu0 0.0
      %355 = vmatpush1.msra.mxu0 %v326
      %356 = vmatprep.subr.mxu0 0.0
      %357 = vmatpush1.msra.mxu0 %v327
      %358 = vmatprep.subr.mxu0 0.0
      %359 = vmatpush1.msra.mxu0 %v328
      %360 = vmatprep.subr.mxu0 0.0
      %361 = vmatpush1.msra.mxu0 %v329
      %362 = vmatprep.subr.mxu0 0.0
      %363 = vmatpush1.msra.mxu0 %v330
      %364 = vmatprep.subr.mxu0 0.0
      %365 = vmatpush1.msra.mxu0 %v331
      %366 = vmatprep.subr.mxu0 0.0
      %367 = vmatpush1.msra.mxu0 %v332
      %368 = vmatprep.subr.mxu0 0.0
      %369 = vmatpush1.msra.mxu0 %v333
      %370 = vmatprep.subr.mxu0 0.0
      %371 = vmatpush1.msra.mxu0 %v334
      %372 = vmatprep.subr.mxu0 0.0
      %373 = vmatpush1.msra.mxu0 %v335
      %374 = vmatprep.subr.mxu0 0.0
      %375 = vmatpush1.msra.mxu0 %v336
      %376 = vmatprep.subr.mxu0 0.0
      %377 = vmatpush1.msra.mxu0 0.0
      %378 = vmatprep.subr.mxu0 0.0
      %379 = vmatpush1.msra.mxu0 0.0
      %380 = vmatprep.subr.mxu0 0.0
      %381 = vmatpush1.msra.mxu0 0.0
      %382 = vmatprep.subr.mxu0 0.0
      %383 = vmatpush1.msra.mxu0 0.0
      %384 = vmatprep.subr.mxu0 0.0
      %385 = vmatpush1.msra.mxu0 0.0
      %386 = vmatprep.subr.mxu0 0.0
      %387 = vmatpush1.msra.mxu0 0.0
      %388 = vmatprep.subr.mxu0 0.0
      %389 = vmatpush1.msra.mxu0 0.0
      %390 = vmatprep.subr.mxu0 0.0
      %391 = vmatpush1.msra.mxu0 0.0
      %392 = vmatprep.subr.mxu0 0.0
      %393 = vmatpush1.msra.mxu0 0.0
      %394 = vmatprep.subr.mxu0 0.0
      %395 = vmatpush1.msra.mxu0 0.0
      %396 = vmatprep.subr.mxu0 0.0
      %397 = vmatpush1.msra.mxu0 0.0
      %398 = vmatprep.subr.mxu0 0.0
      %399 = vmatpush1.msra.mxu0 0.0
      %400 = vmatprep.subr.mxu0 0.0
      %401 = vmatpush1.msra.mxu0 0.0
      %402 = vmatprep.subr.mxu0 0.0
      %403 = vmatpush1.msra.mxu0 0.0
      %404 = vmatprep.subr.mxu0 0.0
      %405 = vmatpush1.msra.mxu0 0.0
      %406 = vmatprep.subr.mxu0 0.0
      %407 = vmatpush1.msra.mxu0 0.0
      %408 = vmatprep.mubr.f32.mxu0 0.0
      %409 = vmatmul.mubr.f32.gmra.mrb[0].mxu0 %v320
      %v410 = vpop.f32.mrb[0].mxu0
      %v411 = vadd.f32 %v342, %v410
      %v412 = vpop.f32.mrb[0].mxu0
      %413 = vdwg.mxu0
      %v414 = vmax.f32 %v411, 0.0
      %v415 = vld [vmem:[#allocation11] sm:$0xff]
      %v416 = vld [vmem:[#allocation11 + $0x8] sm:$0xff]
      %v417 = vld [vmem:[#allocation11 + $0x10] sm:$0xff]
      %v418 = vld [vmem:[#allocation11 + $0x18] sm:$0xff]
      %v419 = vld [vmem:[#allocation11 + $0x20] sm:$0xff]
      %v420 = vld [vmem:[#allocation11 + $0x28] sm:$0xff]
      %v421 = vld [vmem:[#allocation11 + $0x30] sm:$0xff]
      %v422 = vld [vmem:[#allocation11 + $0x38] sm:$0xff]
      %v423 = vld [vmem:[#allocation11 + $0x40] sm:$0xff]
      %v424 = vld [vmem:[#allocation11 + $0x48] sm:$0xff]
      %v425 = vld [vmem:[#allocation11 + $0x50] sm:$0xff]
      %v426 = vld [vmem:[#allocation11 + $0x58] sm:$0xff]
      %v427 = vld [vmem:[#allocation11 + $0x60] sm:$0xff]
      %v428 = vld [vmem:[#allocation11 + $0x68] sm:$0xff]
      %v429 = vld [vmem:[#allocation11 + $0x70] sm:$0xff]
      %v430 = vld [vmem:[#allocation11 + $0x78] sm:$0xff]
      %v431 = vld [vmem:[%s7] sm:$0x1]
      %v433 = vlaneseq
      %v434 = vshrl.u32 %v433, 7
      %v435 = vsub.s32 0, %v434
      %v436 = vrot.slane %v431, %v435
      %438 = vmatprep.subr.mxu0 0.0
      %439 = vmatpush1.msra.mxu0 %v415
      %440 = vmatprep.subr.mxu0 0.0
      %441 = vmatpush1.msra.mxu0 %v416
      %442 = vmatprep.subr.mxu0 0.0
      %443 = vmatpush1.msra.mxu0 %v417
      %444 = vmatprep.subr.mxu0 0.0
      %445 = vmatpush1.msra.mxu0 %v418
      %446 = vmatprep.subr.mxu0 0.0
      %447 = vmatpush1.msra.mxu0 %v419
      %448 = vmatprep.subr.mxu0 0.0
      %449 = vmatpush1.msra.mxu0 %v420
      %450 = vmatprep.subr.mxu0 0.0
      %451 = vmatpush1.msra.mxu0 %v421
      %452 = vmatprep.subr.mxu0 0.0
      %453 = vmatpush1.msra.mxu0 %v422
      %454 = vmatprep.subr.mxu0 0.0
      %455 = vmatpush1.msra.mxu0 %v423
      %456 = vmatprep.subr.mxu0 0.0
      %457 = vmatpush1.msra.mxu0 %v424
      %458 = vmatprep.subr.mxu0 0.0
      %459 = vmatpush1.msra.mxu0 %v425
      %460 = vmatprep.subr.mxu0 0.0
      %461 = vmatpush1.msra.mxu0 %v426
      %462 = vmatprep.subr.mxu0 0.0
      %463 = vmatpush1.msra.mxu0 %v427
      %464 = vmatprep.subr.mxu0 0.0
      %465 = vmatpush1.msra.mxu0 %v428
      %466 = vmatprep.subr.mxu0 0.0
      %467 = vmatpush1.msra.mxu0 %v429
      %468 = vmatprep.subr.mxu0 0.0
      %469 = vmatpush1.msra.mxu0 %v430
      %470 = vmatprep.subr.mxu0 0.0
      %471 = vmatpush1.msra.mxu0 0.0
      %472 = vmatprep.subr.mxu0 0.0
      %473 = vmatpush1.msra.mxu0 0.0
      %474 = vmatprep.subr.mxu0 0.0
      %475 = vmatpush1.msra.mxu0 0.0
      %476 = vmatprep.subr.mxu0 0.0
      %477 = vmatpush1.msra.mxu0 0.0
      %478 = vmatprep.subr.mxu0 0.0
      %479 = vmatpush1.msra.mxu0 0.0
      %480 = vmatprep.subr.mxu0 0.0
      %481 = vmatpush1.msra.mxu0 0.0
      %482 = vmatprep.subr.mxu0 0.0
      %483 = vmatpush1.msra.mxu0 0.0
      %484 = vmatprep.subr.mxu0 0.0
      %485 = vmatpush1.msra.mxu0 0.0
      %486 = vmatprep.subr.mxu0 0.0
      %487 = vmatpush1.msra.mxu0 0.0
      %488 = vmatprep.subr.mxu0 0.0
      %489 = vmatpush1.msra.mxu0 0.0
      %490 = vmatprep.subr.mxu0 0.0
      %491 = vmatpush1.msra.mxu0 0.0
      %492 = vmatprep.subr.mxu0 0.0
      %493 = vmatpush1.msra.mxu0 0.0
      %494 = vmatprep.subr.mxu0 0.0
      %495 = vmatpush1.msra.mxu0 0.0
      %496 = vmatprep.subr.mxu0 0.0
      %497 = vmatpush1.msra.mxu0 0.0
      %498 = vmatprep.subr.mxu0 0.0
      %499 = vmatpush1.msra.mxu0 0.0
      %500 = vmatprep.subr.mxu0 0.0
      %501 = vmatpush1.msra.mxu0 0.0
      %502 = vmatprep.mubr.f32.mxu0 0.0
      %503 = vmatmul.mubr.f32.gmra.mrb[0].mxu0 %v414
      %v504 = vpop.f32.mrb[0].mxu0
      %v505 = vadd.f32 %v436, %v504
      %v506 = vpop.f32.mrb[0].mxu0
      %507 = vdwg.mxu0
      %v508 = vxor.u32 %v505, 2147483648
      %v509 = vmul.f32 %v508, 1.442695
      %v510 = vpow.pop %v509
      %v511 = vadd.f32 %v510, 1.0
      %v512 = vrcp.pop %v511
      %v513 = vmul.f32 1.0, %v512
      %514 = vst [vmem:[#allocation12] sm:$0xff] %v513
    $region61: #{tpu_custom_call.1} parent=1 // pred_fallthru
      _
    // Predicated region
    $region62: #{tpu_custom_call.1} parent=1 // pred_check
      _
    $region63: #{tpu_custom_call.1} parent=1 // pred_check_branch
      %516 = sbr.rel (0) target = $region65
    $region64: #{tpu_custom_call.1} parent=1 // pred_region
      %s518 = ssub.s32 128, 128
      %519 = vsyncadd [#allocation5], %s518
      %s521 = sshll.u32 [#allocation12], 4
      %s522 = int_to_ptr.vmem [resolvable:$true] %s521
      %524 = dma.vmem_to_hbm [thread:$0]  %s522, 128, %s8, [#allocation5]
    $region65: #{tpu_custom_call.1} parent=1 // pred_fallthru
      _
    // Predicated region
    $region66: #{tpu_custom_call.1} parent=1 // pred_check
      _
    $region67: #{tpu_custom_call.1} parent=1 // pred_check_branch
      %526 = sbr.rel (0) target = $region69
    $region68: #{tpu_custom_call.1} parent=1 // pred_region
      %527 = dma.done [#allocation5], 128
    $region69: #{tpu_custom_call.1} parent=1 // pred_fallthru
      _
    %528 = vsyncpa [#allocation4], 1
    %529 = vsyncpa [#allocation7], 1
    %530 = vsyncpa [#allocation10], 1
    %531 = vsyncpa [#allocation5], 1

</llo_original>
